<compile_context>
chip_gen: v7x
topology: tpu7x:2x2x1
jax: 0.10.0
libtpu: 0.0.40
codegen_flags: <defaults>
</compile_context>

<pallas_src>
import jax
import jax.numpy as jnp
from jax.experimental import pallas as pl
from jax.experimental.pallas import tpu as pltpu


def projection_head_kernel(x_ref, w1_ref, b1_ref, w2_ref, b2_ref,
                           gamma_ref, beta_ref, o_ref):
    # bf16 operands on the MXU, fp32 accumulation (preferred_element_type).
    x = x_ref[...].astype(w1_ref.dtype)

    # Linear 1 (fp32 accumulate + fp32 bias).
    x1 = jnp.dot(x, w1_ref[...], preferred_element_type=jnp.float32) + b1_ref[...]

    # GELU.  tanh approximation: the transcendental runs on the EUP instead of
    # a long erf polynomial on the VALU (kernel was VALU-bound for small E).
    # NOTE: intentional, small deviation from nn.GELU()'s exact-erf default;
    # validated against the fp32 erf reference below within 5e-2.
    # Cast to bf16 immediately: it is the second matmul's operand anyway and
    # halves this intermediate's live footprint.
    h = jax.nn.gelu(x1, approximate=True).astype(w2_ref.dtype)

    # Linear 2 (bf16 operands, fp32 accumulate + fp32 bias).
    x2 = jnp.dot(h, w2_ref[...], preferred_element_type=jnp.float32) + b2_ref[...]

    # Dropout: identity in eval mode.
    # TODO(synk): train-mode dropout would use pltpu.prng_seed/prng_random_bits.

    # Skip connection.
    s = x1 + x2

    # LayerNorm over the projection dim, eps = 1e-5, all fp32.  One-pass stats:
    # sum and sum-of-squares are independent cross-lane reductions.
    p = s.shape[-1]
    sum_s = jnp.sum(s, axis=-1, keepdims=True)
    sum_sq = jnp.sum(s * s, axis=-1, keepdims=True)
    mean = sum_s * (1.0 / p)
    var = jnp.maximum(sum_sq * (1.0 / p) - mean * mean, 0.0)
    y = (s - mean) * jax.lax.rsqrt(var + 1e-5)
    o_ref[...] = (y * gamma_ref[...] + beta_ref[...]).astype(o_ref.dtype)


def _cdiv(a, b):
    return -(-a // b)


def _round_up(n, m):
    return ((n + m - 1) // m) * m


def _physical_vmem_bytes():
    try:
        return int(pltpu.get_tpu_info().vmem_capacity_bytes)
    except Exception:
        return 64 * 1024 * 1024  # conservative default (v7x per-TC size)


def projection_head(x, w1, b1, w2, b2, gamma, beta, *,
                    block_batch=None, matmul_dtype=jnp.bfloat16):
    """x: (B, E); w1: (E, P); w2: (P, P); b1/b2/gamma/beta: (P,). Returns (B, P)."""
    B, E = x.shape
    P = w1.shape[1]

    # Per-generation VMEM budget: ~7/8 of physical VMEM (≈56 MiB on v7x,
    # ≈112 MiB on v5e/v6e) — headroom left for compiler internal scratch.
    phys_vmem = _physical_vmem_bytes()
    vmem_cap = (phys_vmem // 8) * 7

    if block_batch is None:
        # Larger batch tiles amortize per-step pipeline overhead; use 512 only
        # when the VMEM budget allows (v5e/v6e), else 256.
        block_batch = 512 if vmem_cap >= 96 * 1024 * 1024 else 256

    # Batch tile: multiple of the sublane packing granularity; no padding of x
    # (the ragged final block is clipped/masked by Pallas).  Target >= 2 grid
    # steps so the "parallel" batch axis can shard across v7x's 2 TensorCores.
    sub = 8 if jnp.dtype(x.dtype).itemsize == 4 else 16
    bb = min(block_batch, _round_up(_cdiv(B, 2), sub))
    bb = max(bb, sub)
    grid = (_cdiv(B, bb),)

    # Weights should be pre-cast/cached to bf16 by the caller; these casts are
    # no-ops in that case (no per-call convert over the full weight matrices).
    w1m = w1 if w1.dtype == matmul_dtype else w1.astype(matmul_dtype)
    w2m = w2 if w2.dtype == matmul_dtype else w2.astype(matmul_dtype)

    # 2-D fp32 views of the 1-D parameters for (sublane, lane) layout.
    b1_2d = b1.reshape(1, P).astype(jnp.float32)
    b2_2d = b2.reshape(1, P).astype(jnp.float32)
    gamma_2d = gamma.reshape(1, P).astype(jnp.float32)
    beta_2d = beta.reshape(1, P).astype(jnp.float32)

    itm = jnp.dtype(matmul_dtype).itemsize
    x_itm = jnp.dtype(x.dtype).itemsize
    weight_bytes = (E * P + P * P) * itm           # single-buffered (constant)
    io_bytes = 2 * 2 * (bb * E + bb * P) * x_itm   # double-buffered x / out
    interm_bytes = 4 * bb * P * 4                  # x1/x2/s/LN fp32 live values
    param_bytes = 4 * P * 4 * 2
    vmem_limit = int(max(16 * 1024 * 1024,
                         min(vmem_cap,
                             weight_bytes + io_bytes + interm_bytes
                             + param_bytes + (2 << 20))))
    # TODO(synk): if E/P grow so large that resident W1+W2 exceed the VMEM cap
    # (mainly v7x's 64 MiB), add K/N weight tiling with an fp32 accumulator
    # instead of whole-weight blocks.

    cost = pl.CostEstimate(
        flops=2 * B * (E * P + P * P),
        transcendentals=B * P,                     # GELU
        bytes_accessed=(B * E * x_itm + weight_bytes
                        + B * P * x_itm + 4 * P * 4),
    )

    def build(single_buffer_params):
        kw = {"pipeline_mode": pl.Buffered(1)} if single_buffer_params else {}

        def const_spec(shape):
            # Constant index map across the grid: fetched once, kept resident.
            return pl.BlockSpec(shape, lambda i: (0, 0), **kw)

        return pl.pallas_call(
            projection_head_kernel,
            out_shape=jax.ShapeDtypeStruct((B, P), x.dtype),
            grid_spec=pltpu.PrefetchScalarGridSpec(
                num_scalar_prefetch=0,
                grid=grid,
                in_specs=[
                    pl.BlockSpec((bb, E), lambda i: (i, 0)),   # x tile (streamed)
                    const_spec((E, P)),                        # W1 (resident, bf16)
                    const_spec((1, P)),                        # b1
                    const_spec((P, P)),                        # W2 (resident, bf16)
                    const_spec((1, P)),                        # b2
                    const_spec((1, P)),                        # gamma
                    const_spec((1, P)),                        # beta
                ],
                out_specs=pl.BlockSpec((bb, P), lambda i: (i, 0)),
            ),
            compiler_params=pltpu.CompilerParams(
                dimension_semantics=("parallel",),
                vmem_limit_bytes=vmem_limit,
            ),
            cost_estimate=cost,
        )

    args = (x, w1m, b1_2d, w2m, b2_2d, gamma_2d, beta_2d)
    try:
        return build(True)(*args)
    except Exception:
        # Fallback: default double-buffering if single-buffering of the
        # constant-index params is rejected by this JAX/Mosaic version.
        return build(False)(*args)


if __name__ == "__main__":
    # Small shapes consistent with the module: batch=8, embedding_dim=32,
    # projection_dim=256 (module default).
    batch, embedding_dim, projection_dim = 8, 32, 256

    key = jax.random.PRNGKey(0)
    kx, kw1, kb1, kw2, kb2 = jax.random.split(key, 5)

    x = jax.random.normal(kx, (batch, embedding_dim), dtype=jnp.float32)

    # Deterministic parameter init (synthetic; no checkpoint load).
    w1 = jax.random.normal(kw1, (embedding_dim, projection_dim), jnp.float32) * 0.05
    b1 = jax.random.normal(kb1, (projection_dim,), jnp.float32) * 0.01
    w2 = jax.random.normal(kw2, (projection_dim, projection_dim), jnp.float32) * 0.05
    b2 = jax.random.normal(kb2, (projection_dim,), jnp.float32) * 0.01
    gamma = jnp.ones((projection_dim,), jnp.float32)
    beta = jnp.zeros((projection_dim,), jnp.float32)

    # One-time bf16 cast of the weights ("cached params"): weight DMA is the
    # only per-call weight traffic.
    w1_bf16 = w1.astype(jnp.bfloat16)
    w2_bf16 = w2.astype(jnp.bfloat16)

    out = projection_head(x, w1_bf16, b1, w2_bf16, b2, gamma, beta)
    jax.block_until_ready(out)

    # Reference check in plain fp32 JAX with exact-erf GELU (nn.GELU default).
    # Tolerance covers the intentional bf16 matmul operands + tanh GELU.
    x1 = x @ w1 + b1
    x2 = jax.nn.gelu(x1, approximate=False) @ w2 + b2
    s = x1 + x2
    mean = s.mean(-1, keepdims=True)
    var = ((s - mean) ** 2).mean(-1, keepdims=True)
    ref = (s - mean) / jnp.sqrt(var + 1e-5) * gamma + beta
    assert out.shape == ref.shape
    max_err = float(jnp.max(jnp.abs(out - ref)))
    assert jnp.allclose(out, ref, atol=5e-2, rtol=5e-2), max_err

    print("KERNEL_OK")
</pallas_src>

<mosaic_0001>
module attributes {stable_mosaic.version = 11 : i64} {
  func.func @projection_head_kernel(%arg0: i32, %arg1: memref<8x32xf32, #tpu.memory_space<vmem>>, %arg2: memref<32x256xbf16, #tpu.memory_space<vmem>>, %arg3: memref<1x256xf32, #tpu.memory_space<vmem>>, %arg4: memref<256x256xbf16, #tpu.memory_space<vmem>>, %arg5: memref<1x256xf32, #tpu.memory_space<vmem>>, %arg6: memref<1x256xf32, #tpu.memory_space<vmem>>, %arg7: memref<1x256xf32, #tpu.memory_space<vmem>>, %arg8: memref<8x256xf32, #tpu.memory_space<vmem>>) attributes {dimension_semantics = [#tpu.dimension_semantics<parallel>], iteration_bounds = array<i64: 1>, scalar_prefetch = 0 : i64, scratch_operands = 0 : i64, tpu.core_type = #tpu.core_type<tc>, window_params = [{transform_indices = @transform_0, window_bounds = array<i64: 8, 32>}, {pipeline_mode = #tpu.pipeline_mode<synchronous>, transform_indices = @transform_1, window_bounds = array<i64: 32, 256>}, {pipeline_mode = #tpu.pipeline_mode<synchronous>, transform_indices = @transform_2, window_bounds = array<i64: 1, 256>}, {pipeline_mode = #tpu.pipeline_mode<synchronous>, transform_indices = @transform_3, window_bounds = array<i64: 256, 256>}, {pipeline_mode = #tpu.pipeline_mode<synchronous>, transform_indices = @transform_4, window_bounds = array<i64: 1, 256>}, {pipeline_mode = #tpu.pipeline_mode<synchronous>, transform_indices = @transform_5, window_bounds = array<i64: 1, 256>}, {pipeline_mode = #tpu.pipeline_mode<synchronous>, transform_indices = @transform_6, window_bounds = array<i64: 1, 256>}, {transform_indices = @transform_7, window_bounds = array<i64: 8, 256>}]} {
    %c0 = arith.constant 0 : index
    %c0_0 = arith.constant 0 : index
    %0 = vector.load %arg1[%c0, %c0_0] : memref<8x32xf32, #tpu.memory_space<vmem>>, vector<8x32xf32>
    %1 = arith.truncf %0 : vector<8x32xf32> to vector<8x32xbf16>
    %c0_1 = arith.constant 0 : index
    %c0_2 = arith.constant 0 : index
    %2 = vector.load %arg2[%c0_1, %c0_2] : memref<32x256xbf16, #tpu.memory_space<vmem>>, vector<32x256xbf16>
    %cst = arith.constant dense<0.000000e+00> : vector<8x256xf32>
    %3 = tpu.matmul %1, %2, %cst {dimension_numbers = #tpu.dot_dimension_numbers<[1], [0], [0], [1], [0, 0, 1, 1], [], []>} : vector<8x32xbf16>, vector<32x256xbf16>, vector<8x256xf32> -> vector<8x256xf32>
    %c0_3 = arith.constant 0 : index
    %c0_4 = arith.constant 0 : index
    %4 = vector.load %arg3[%c0_3, %c0_4] : memref<1x256xf32, #tpu.memory_space<vmem>>, vector<1x256xf32>
    %5 = vector.broadcast %4 : vector<1x256xf32> to vector<8x256xf32>
    %6 = arith.addf %3, %5 : vector<8x256xf32>
    %7 = arith.mulf %6, %6 : vector<8x256xf32>
    %8 = arith.mulf %6, %7 : vector<8x256xf32>
    %cst_5 = arith.constant 4.471500e-02 : f32
    %9 = vector.broadcast %cst_5 : f32 to vector<8x256xf32>
    %10 = arith.mulf %9, %8 : vector<8x256xf32>
    %11 = arith.addf %6, %10 : vector<8x256xf32>
    %cst_6 = arith.constant 0.797884583 : f32
    %12 = vector.broadcast %cst_6 : f32 to vector<8x256xf32>
    %13 = arith.mulf %12, %11 : vector<8x256xf32>
    %14 = math.tanh %13 : vector<8x256xf32>
    %cst_7 = arith.constant 1.000000e+00 : f32
    %15 = vector.broadcast %cst_7 : f32 to vector<8x256xf32>
    %16 = arith.addf %15, %14 : vector<8x256xf32>
    %cst_8 = arith.constant 5.000000e-01 : f32
    %17 = vector.broadcast %cst_8 : f32 to vector<8x256xf32>
    %18 = arith.mulf %17, %16 : vector<8x256xf32>
    %19 = arith.mulf %6, %18 : vector<8x256xf32>
    %20 = arith.truncf %19 : vector<8x256xf32> to vector<8x256xbf16>
    %c0_9 = arith.constant 0 : index
    %c0_10 = arith.constant 0 : index
    %21 = vector.load %arg4[%c0_9, %c0_10] : memref<256x256xbf16, #tpu.memory_space<vmem>>, vector<256x256xbf16>
    %cst_11 = arith.constant dense<0.000000e+00> : vector<8x256xf32>
    %22 = tpu.matmul %20, %21, %cst_11 {dimension_numbers = #tpu.dot_dimension_numbers<[1], [0], [0], [1], [0, 0, 1, 1], [], []>} : vector<8x256xbf16>, vector<256x256xbf16>, vector<8x256xf32> -> vector<8x256xf32>
    %c0_12 = arith.constant 0 : index
    %c0_13 = arith.constant 0 : index
    %23 = vector.load %arg5[%c0_12, %c0_13] : memref<1x256xf32, #tpu.memory_space<vmem>>, vector<1x256xf32>
    %24 = vector.broadcast %23 : vector<1x256xf32> to vector<8x256xf32>
    %25 = arith.addf %22, %24 : vector<8x256xf32>
    %26 = arith.addf %6, %25 : vector<8x256xf32>
    %cst_14 = arith.constant dense<0.000000e+00> : vector<8xf32>
    %27 = vector.multi_reduction <add>, %26, %cst_14 [1] : vector<8x256xf32> to vector<8xf32>
    %28 = vector.shape_cast %27 : vector<8xf32> to vector<8x1xf32>
    %29 = arith.mulf %26, %26 : vector<8x256xf32>
    %cst_15 = arith.constant dense<0.000000e+00> : vector<8xf32>
    %30 = vector.multi_reduction <add>, %29, %cst_15 [1] : vector<8x256xf32> to vector<8xf32>
    %31 = vector.shape_cast %30 : vector<8xf32> to vector<8x1xf32>
    %cst_16 = arith.constant 3.906250e-03 : f32
    %32 = vector.broadcast %cst_16 : f32 to vector<8x1xf32>
    %33 = arith.mulf %28, %32 : vector<8x1xf32>
    %cst_17 = arith.constant 3.906250e-03 : f32
    %34 = vector.broadcast %cst_17 : f32 to vector<8x1xf32>
    %35 = arith.mulf %31, %34 : vector<8x1xf32>
    %36 = arith.mulf %33, %33 : vector<8x1xf32>
    %37 = arith.subf %35, %36 : vector<8x1xf32>
    %cst_18 = arith.constant 0.000000e+00 : f32
    %38 = vector.broadcast %cst_18 : f32 to vector<8x1xf32>
    %39 = arith.maximumf %37, %38 : vector<8x1xf32>
    %40 = vector.broadcast %33 : vector<8x1xf32> to vector<8x256xf32>
    %41 = arith.subf %26, %40 : vector<8x256xf32>
    %cst_19 = arith.constant 9.99999974E-6 : f32
    %42 = vector.broadcast %cst_19 : f32 to vector<8x1xf32>
    %43 = arith.addf %39, %42 : vector<8x1xf32>
    %44 = math.rsqrt %43 : vector<8x1xf32>
    %45 = vector.broadcast %44 : vector<8x1xf32> to vector<8x256xf32>
    %46 = arith.mulf %41, %45 : vector<8x256xf32>
    %c0_20 = arith.constant 0 : index
    %c0_21 = arith.constant 0 : index
    %47 = vector.load %arg6[%c0_20, %c0_21] : memref<1x256xf32, #tpu.memory_space<vmem>>, vector<1x256xf32>
    %48 = vector.broadcast %47 : vector<1x256xf32> to vector<8x256xf32>
    %49 = arith.mulf %46, %48 : vector<8x256xf32>
    %c0_22 = arith.constant 0 : index
    %c0_23 = arith.constant 0 : index
    %50 = vector.load %arg7[%c0_22, %c0_23] : memref<1x256xf32, #tpu.memory_space<vmem>>, vector<1x256xf32>
    %51 = vector.broadcast %50 : vector<1x256xf32> to vector<8x256xf32>
    %52 = arith.addf %49, %51 : vector<8x256xf32>
    %c0_24 = arith.constant 0 : index
    %c0_25 = arith.constant 0 : index
    %53 = vector.load %arg8[%c0_24, %c0_25] : memref<8x256xf32, #tpu.memory_space<vmem>>, vector<8x256xf32>
    tpu.vector_store %arg8[%c0_24, %c0_25], %52 {strides = array<i32>} : memref<8x256xf32, #tpu.memory_space<vmem>>, vector<8x256xf32>,
    return
  }
  func.func @transform_0(%arg0: i32) -> (i32, i32) {
    %c0_i32 = arith.constant 0 : i32
    %c0_i32_0 = arith.constant 0 : i32
    return %arg0, %c0_i32 : i32, i32
  }
  func.func @transform_1(%arg0: i32) -> (i32, i32) {
    %c0_i32 = arith.constant 0 : i32
    %c0_i32_0 = arith.constant 0 : i32
    %c0_i32_1 = arith.constant 0 : i32
    return %c0_i32, %c0_i32_0 : i32, i32
  }
  func.func @transform_2(%arg0: i32) -> (i32, i32) {
    %c0_i32 = arith.constant 0 : i32
    %c0_i32_0 = arith.constant 0 : i32
    %c0_i32_1 = arith.constant 0 : i32
    return %c0_i32, %c0_i32_0 : i32, i32
  }
  func.func @transform_3(%arg0: i32) -> (i32, i32) {
    %c0_i32 = arith.constant 0 : i32
    %c0_i32_0 = arith.constant 0 : i32
    %c0_i32_1 = arith.constant 0 : i32
    return %c0_i32, %c0_i32_0 : i32, i32
  }
  func.func @transform_4(%arg0: i32) -> (i32, i32) {
    %c0_i32 = arith.constant 0 : i32
    %c0_i32_0 = arith.constant 0 : i32
    %c0_i32_1 = arith.constant 0 : i32
    return %c0_i32, %c0_i32_0 : i32, i32
  }
  func.func @transform_5(%arg0: i32) -> (i32, i32) {
    %c0_i32 = arith.constant 0 : i32
    %c0_i32_0 = arith.constant 0 : i32
    %c0_i32_1 = arith.constant 0 : i32
    return %c0_i32, %c0_i32_0 : i32, i32
  }
  func.func @transform_6(%arg0: i32) -> (i32, i32) {
    %c0_i32 = arith.constant 0 : i32
    %c0_i32_0 = arith.constant 0 : i32
    %c0_i32_1 = arith.constant 0 : i32
    return %c0_i32, %c0_i32_0 : i32, i32
  }
  func.func @transform_7(%arg0: i32) -> (i32, i32) {
    %c0_i32 = arith.constant 0 : i32
    %c0_i32_0 = arith.constant 0 : i32
    return %arg0, %c0_i32 : i32, i32
  }
}

module attributes {stable_mosaic.version = 11 : i64} {
  func.func @projection_head_kernel(%arg0: i32, %arg1: memref<8x32xf32, #tpu.memory_space<vmem>>, %arg2: memref<32x256xbf16, #tpu.memory_space<vmem>>, %arg3: memref<1x256xf32, #tpu.memory_space<vmem>>, %arg4: memref<256x256xbf16, #tpu.memory_space<vmem>>, %arg5: memref<1x256xf32, #tpu.memory_space<vmem>>, %arg6: memref<1x256xf32, #tpu.memory_space<vmem>>, %arg7: memref<1x256xf32, #tpu.memory_space<vmem>>, %arg8: memref<8x256xf32, #tpu.memory_space<vmem>>) attributes {dimension_semantics = [#tpu.dimension_semantics<parallel>], iteration_bounds = array<i64: 1>, scalar_prefetch = 0 : i64, scratch_operands = 0 : i64, tpu.core_type = #tpu.core_type<tc>, window_params = [{transform_indices = @transform_0, window_bounds = array<i64: 8, 32>}, {pipeline_mode = #tpu.pipeline_mode<synchronous>, transform_indices = @transform_1, window_bounds = array<i64: 32, 256>}, {pipeline_mode = #tpu.pipeline_mode<synchronous>, transform_indices = @transform_2, window_bounds = array<i64: 1, 256>}, {pipeline_mode = #tpu.pipeline_mode<synchronous>, transform_indices = @transform_3, window_bounds = array<i64: 256, 256>}, {pipeline_mode = #tpu.pipeline_mode<synchronous>, transform_indices = @transform_4, window_bounds = array<i64: 1, 256>}, {pipeline_mode = #tpu.pipeline_mode<synchronous>, transform_indices = @transform_5, window_bounds = array<i64: 1, 256>}, {pipeline_mode = #tpu.pipeline_mode<synchronous>, transform_indices = @transform_6, window_bounds = array<i64: 1, 256>}, {transform_indices = @transform_7, window_bounds = array<i64: 8, 256>}]} {
    %c0 = arith.constant 0 : index
    %c0_0 = arith.constant 0 : index
    %0 = vector.load %arg1[%c0, %c0_0] : memref<8x32xf32, #tpu.memory_space<vmem>>, vector<8x32xf32>
    %1 = arith.truncf %0 : vector<8x32xf32> to vector<8x32xbf16>
    %c0_1 = arith.constant 0 : index
    %c0_2 = arith.constant 0 : index
    %2 = vector.load %arg2[%c0_1, %c0_2] : memref<32x256xbf16, #tpu.memory_space<vmem>>, vector<32x256xbf16>
    %cst = arith.constant dense<0.000000e+00> : vector<8x256xf32>
    %3 = tpu.matmul %1, %2, %cst {dimension_numbers = #tpu.dot_dimension_numbers<[1], [0], [0], [1], [0, 0, 1, 1], [], []>} : vector<8x32xbf16>, vector<32x256xbf16>, vector<8x256xf32> -> vector<8x256xf32>
    %c0_3 = arith.constant 0 : index
    %c0_4 = arith.constant 0 : index
    %4 = vector.load %arg3[%c0_3, %c0_4] : memref<1x256xf32, #tpu.memory_space<vmem>>, vector<1x256xf32>
    %5 = vector.broadcast %4 : vector<1x256xf32> to vector<8x256xf32>
    %6 = arith.addf %3, %5 : vector<8x256xf32>
    %7 = arith.mulf %6, %6 : vector<8x256xf32>
    %8 = arith.mulf %6, %7 : vector<8x256xf32>
    %cst_5 = arith.constant 4.471500e-02 : f32
    %9 = vector.broadcast %cst_5 : f32 to vector<8x256xf32>
    %10 = arith.mulf %9, %8 : vector<8x256xf32>
    %11 = arith.addf %6, %10 : vector<8x256xf32>
    %cst_6 = arith.constant 0.797884583 : f32
    %12 = vector.broadcast %cst_6 : f32 to vector<8x256xf32>
    %13 = arith.mulf %12, %11 : vector<8x256xf32>
    %14 = math.tanh %13 : vector<8x256xf32>
    %cst_7 = arith.constant 1.000000e+00 : f32
    %15 = vector.broadcast %cst_7 : f32 to vector<8x256xf32>
    %16 = arith.addf %15, %14 : vector<8x256xf32>
    %cst_8 = arith.constant 5.000000e-01 : f32
    %17 = vector.broadcast %cst_8 : f32 to vector<8x256xf32>
    %18 = arith.mulf %17, %16 : vector<8x256xf32>
    %19 = arith.mulf %6, %18 : vector<8x256xf32>
    %20 = arith.truncf %19 : vector<8x256xf32> to vector<8x256xbf16>
    %c0_9 = arith.constant 0 : index
    %c0_10 = arith.constant 0 : index
    %21 = vector.load %arg4[%c0_9, %c0_10] : memref<256x256xbf16, #tpu.memory_space<vmem>>, vector<256x256xbf16>
    %cst_11 = arith.constant dense<0.000000e+00> : vector<8x256xf32>
    %22 = tpu.matmul %20, %21, %cst_11 {dimension_numbers = #tpu.dot_dimension_numbers<[1], [0], [0], [1], [0, 0, 1, 1], [], []>} : vector<8x256xbf16>, vector<256x256xbf16>, vector<8x256xf32> -> vector<8x256xf32>
    %c0_12 = arith.constant 0 : index
    %c0_13 = arith.constant 0 : index
    %23 = vector.load %arg5[%c0_12, %c0_13] : memref<1x256xf32, #tpu.memory_space<vmem>>, vector<1x256xf32>
    %24 = vector.broadcast %23 : vector<1x256xf32> to vector<8x256xf32>
    %25 = arith.addf %22, %24 : vector<8x256xf32>
    %26 = arith.addf %6, %25 : vector<8x256xf32>
    %cst_14 = arith.constant dense<0.000000e+00> : vector<8xf32>
    %27 = vector.multi_reduction <add>, %26, %cst_14 [1] : vector<8x256xf32> to vector<8xf32>
    %28 = vector.shape_cast %27 : vector<8xf32> to vector<8x1xf32>
    %29 = arith.mulf %26, %26 : vector<8x256xf32>
    %cst_15 = arith.constant dense<0.000000e+00> : vector<8xf32>
    %30 = vector.multi_reduction <add>, %29, %cst_15 [1] : vector<8x256xf32> to vector<8xf32>
    %31 = vector.shape_cast %30 : vector<8xf32> to vector<8x1xf32>
    %cst_16 = arith.constant 3.906250e-03 : f32
    %32 = vector.broadcast %cst_16 : f32 to vector<8x1xf32>
    %33 = arith.mulf %28, %32 : vector<8x1xf32>
    %cst_17 = arith.constant 3.906250e-03 : f32
    %34 = vector.broadcast %cst_17 : f32 to vector<8x1xf32>
    %35 = arith.mulf %31, %34 : vector<8x1xf32>
    %36 = arith.mulf %33, %33 : vector<8x1xf32>
    %37 = arith.subf %35, %36 : vector<8x1xf32>
    %cst_18 = arith.constant 0.000000e+00 : f32
    %38 = vector.broadcast %cst_18 : f32 to vector<8x1xf32>
    %39 = arith.maximumf %37, %38 : vector<8x1xf32>
    %40 = vector.broadcast %33 : vector<8x1xf32> to vector<8x256xf32>
    %41 = arith.subf %26, %40 : vector<8x256xf32>
    %cst_19 = arith.constant 9.99999974E-6 : f32
    %42 = vector.broadcast %cst_19 : f32 to vector<8x1xf32>
    %43 = arith.addf %39, %42 : vector<8x1xf32>
    %44 = math.rsqrt %43 : vector<8x1xf32>
    %45 = vector.broadcast %44 : vector<8x1xf32> to vector<8x256xf32>
    %46 = arith.mulf %41, %45 : vector<8x256xf32>
    %c0_20 = arith.constant 0 : index
    %c0_21 = arith.constant 0 : index
    %47 = vector.load %arg6[%c0_20, %c0_21] : memref<1x256xf32, #tpu.memory_space<vmem>>, vector<1x256xf32>
    %48 = vector.broadcast %47 : vector<1x256xf32> to vector<8x256xf32>
    %49 = arith.mulf %46, %48 : vector<8x256xf32>
    %c0_22 = arith.constant 0 : index
    %c0_23 = arith.constant 0 : index
    %50 = vector.load %arg7[%c0_22, %c0_23] : memref<1x256xf32, #tpu.memory_space<vmem>>, vector<1x256xf32>
    %51 = vector.broadcast %50 : vector<1x256xf32> to vector<8x256xf32>
    %52 = arith.addf %49, %51 : vector<8x256xf32>
    %c0_24 = arith.constant 0 : index
    %c0_25 = arith.constant 0 : index
    %53 = vector.load %arg8[%c0_24, %c0_25] : memref<8x256xf32, #tpu.memory_space<vmem>>, vector<8x256xf32>
    tpu.vector_store %arg8[%c0_24, %c0_25], %52 {strides = array<i32>} : memref<8x256xf32, #tpu.memory_space<vmem>>, vector<8x256xf32>,
    return
  }
  func.func @transform_0(%arg0: i32) -> (i32, i32) {
    %c0_i32 = arith.constant 0 : i32
    %c0_i32_0 = arith.constant 0 : i32
    return %arg0, %c0_i32 : i32, i32
  }
  func.func @transform_1(%arg0: i32) -> (i32, i32) {
    %c0_i32 = arith.constant 0 : i32
    %c0_i32_0 = arith.constant 0 : i32
    %c0_i32_1 = arith.constant 0 : i32
    return %c0_i32, %c0_i32_0 : i32, i32
  }
  func.func @transform_2(%arg0: i32) -> (i32, i32) {
    %c0_i32 = arith.constant 0 : i32
    %c0_i32_0 = arith.constant 0 : i32
    %c0_i32_1 = arith.constant 0 : i32
    return %c0_i32, %c0_i32_0 : i32, i32
  }
  func.func @transform_3(%arg0: i32) -> (i32, i32) {
    %c0_i32 = arith.constant 0 : i32
    %c0_i32_0 = arith.constant 0 : i32
    %c0_i32_1 = arith.constant 0 : i32
    return %c0_i32, %c0_i32_0 : i32, i32
  }
  func.func @transform_4(%arg0: i32) -> (i32, i32) {
    %c0_i32 = arith.constant 0 : i32
    %c0_i32_0 = arith.constant 0 : i32
    %c0_i32_1 = arith.constant 0 : i32
    return %c0_i32, %c0_i32_0 : i32, i32
  }
  func.func @transform_5(%arg0: i32) -> (i32, i32) {
    %c0_i32 = arith.constant 0 : i32
    %c0_i32_0 = arith.constant 0 : i32
    %c0_i32_1 = arith.constant 0 : i32
    return %c0_i32, %c0_i32_0 : i32, i32
  }
  func.func @transform_6(%arg0: i32) -> (i32, i32) {
    %c0_i32 = arith.constant 0 : i32
    %c0_i32_0 = arith.constant 0 : i32
    %c0_i32_1 = arith.constant 0 : i32
    return %c0_i32, %c0_i32_0 : i32, i32
  }
  func.func @transform_7(%arg0: i32) -> (i32, i32) {
    %c0_i32 = arith.constant 0 : i32
    %c0_i32_0 = arith.constant 0 : i32
    return %arg0, %c0_i32 : i32, i32
  }
}

</mosaic_0001>

<llo_original>
// kernel: tpu_custom_call.1
$region0: #{tpu_custom_call.1}
  #allocation0 [shape = 'u32[]', space=smem, size = 0x4, offset = 0x4, fixed_abs, tag = 'smem constant byte address 0x4 - core index']
  #allocation1 [shape = 'u32[144,128]{1,0:T(1,128)}', space=vmem, size = 0x12000, scoped, tag = 'internal scratch']
  %s0 = inlined_call_operand.hbm [shape: f32[8,32], index: 0, kind: input, shape index: {}]
  %s1 = inlined_call_operand.hbm [shape: bf16[32,256], index: 1, kind: input, shape index: {}]
  %s2 = inlined_call_operand.vmem [shape: f32[1,256], index: 2, kind: input, shape index: {}]
  %s3 = inlined_call_operand.hbm [shape: bf16[256,256], index: 3, kind: input, shape index: {}]
  %s4 = inlined_call_operand.vmem [shape: f32[1,256], index: 4, kind: input, shape index: {}]
  %s5 = inlined_call_operand.vmem [shape: f32[1,256], index: 5, kind: input, shape index: {}]
  %s6 = inlined_call_operand.vmem [shape: f32[1,256], index: 6, kind: input, shape index: {}]
  %s7 = inlined_call_operand.hbm [shape: f32[8,256], index: 7, kind: output, shape index: {}]
  %s8 = sld [smem:[#allocation0]]
  $region50: #{tpu_custom_call.1} parent=0
    _
  %s10 = ssub.s32 1, %s8
  %s11 = scalar_select 0, %s10, %s8
  $region1: #{tpu_custom_call.1} parent=0
    #allocation2 [shape = 'u8[4096]{0}', space=vmem, size = 0x1000, scoped, tag = 'input window, operand 0, single buffered']
    #allocation3 [shape = 's32[1]{0}', space=sflag, size = 0x4, scoped, tag = 'scoped memory for tpu_custom_call.1']
    #allocation4 [shape = 's32[1]{0}', space=sflag, size = 0x4, scoped, tag = 'scoped memory for tpu_custom_call.1']
    #allocation5 [shape = 'u8[16384]{0}', space=vmem, size = 0x4000, scoped, tag = 'input window, operand 1, single buffered']
    #allocation6 [shape = 's32[1]{0}', space=sflag, size = 0x4, scoped, tag = 'scoped memory for tpu_custom_call.1']
    #allocation7 [shape = 'u8[131072]{0}', space=vmem, size = 0x20000, scoped, tag = 'input window, operand 3, single buffered']
    #allocation8 [shape = 'u8[8192]{0}', space=vmem, size = 0x2000, scoped, tag = 'output window, operand 0, single buffered']
    %12 = vsyncpa [#allocation3], 0
    %13 = vsyncpa [#allocation6], 0
    %14 = vsyncpa [#allocation4], 0
    // Predicated region
    $region2: #{tpu_custom_call.1} parent=1 // pred_check
      _
    $region3: #{tpu_custom_call.1} parent=1 // pred_check_branch
      %16 = sbr.rel (0) target = $region5
    $region4: #{tpu_custom_call.1} parent=1 // pred_region
      %s18 = ssub.s32 128, 128
      %19 = vsyncadd [#allocation3], %s18
      %s21 = sshll.u32 [#allocation2], 4
      %s22 = int_to_ptr.vmem [resolvable:$true] %s21
      %24 = dma.hbm_to_vmem [thread:$0]  %s0, 128, %s22, [#allocation3]
    $region5: #{tpu_custom_call.1} parent=1 // pred_fallthru
      _
    // Predicated region
    $region6: #{tpu_custom_call.1} parent=1 // pred_check
      _
    $region7: #{tpu_custom_call.1} parent=1 // pred_check_branch
      %26 = sbr.rel (0) target = $region9
    $region8: #{tpu_custom_call.1} parent=1 // pred_region
      %s28 = ssub.s32 512, 512
      %29 = vsyncadd [#allocation6], %s28
      %s30 = sshll.u32 [#allocation5], 4
      %s31 = int_to_ptr.vmem [resolvable:$true] %s30
      %36 = dma.hbm_to_vmem [thread:$0]  %s1, 512, %s31, [#allocation6], 128, 128, 8
    $region9: #{tpu_custom_call.1} parent=1 // pred_fallthru
      _
    // Predicated region
    $region10: #{tpu_custom_call.1} parent=1 // pred_check
      _
    $region11: #{tpu_custom_call.1} parent=1 // pred_check_branch
      %38 = sbr.rel (0) target = $region13
    $region12: #{tpu_custom_call.1} parent=1 // pred_region
      _
    $region13: #{tpu_custom_call.1} parent=1 // pred_fallthru
      _
    // Predicated region
    $region14: #{tpu_custom_call.1} parent=1 // pred_check
      _
    $region15: #{tpu_custom_call.1} parent=1 // pred_check_branch
      %40 = sbr.rel (0) target = $region17
    $region16: #{tpu_custom_call.1} parent=1 // pred_region
      %s42 = ssub.s32 4096, 4096
      %43 = vsyncadd [#allocation6], %s42
      %s44 = sshll.u32 [#allocation7], 4
      %s45 = int_to_ptr.vmem [resolvable:$true] %s44
      %50 = dma.hbm_to_vmem [thread:$0]  %s3, 4096, %s45, [#allocation6], 128, 128, 8
    $region17: #{tpu_custom_call.1} parent=1 // pred_fallthru
      _
    // Predicated region
    $region18: #{tpu_custom_call.1} parent=1 // pred_check
      _
    $region19: #{tpu_custom_call.1} parent=1 // pred_check_branch
      %52 = sbr.rel (0) target = $region21
    $region20: #{tpu_custom_call.1} parent=1 // pred_region
      _
    $region21: #{tpu_custom_call.1} parent=1 // pred_fallthru
      _
    // Predicated region
    $region22: #{tpu_custom_call.1} parent=1 // pred_check
      _
    $region23: #{tpu_custom_call.1} parent=1 // pred_check_branch
      %54 = sbr.rel (0) target = $region25
    $region24: #{tpu_custom_call.1} parent=1 // pred_region
      _
    $region25: #{tpu_custom_call.1} parent=1 // pred_fallthru
      _
    // Predicated region
    $region26: #{tpu_custom_call.1} parent=1 // pred_check
      _
    $region27: #{tpu_custom_call.1} parent=1 // pred_check_branch
      %56 = sbr.rel (0) target = $region29
    $region28: #{tpu_custom_call.1} parent=1 // pred_region
      _
    $region29: #{tpu_custom_call.1} parent=1 // pred_fallthru
      _
    // Predicated region
    $region30: #{tpu_custom_call.1} parent=1 // pred_check
      _
    $region31: #{tpu_custom_call.1} parent=1 // pred_check_branch
      %58 = sbr.rel (0) target = $region33
    $region32: #{tpu_custom_call.1} parent=1 // pred_region
      %59 = dma.done [#allocation3], 128
    $region33: #{tpu_custom_call.1} parent=1 // pred_fallthru
      _
    // Predicated region
    $region34: #{tpu_custom_call.1} parent=1 // pred_check
      _
    $region35: #{tpu_custom_call.1} parent=1 // pred_check_branch
      %61 = sbr.rel (0) target = $region37
    $region36: #{tpu_custom_call.1} parent=1 // pred_region
      %62 = dma.done [#allocation6], 512
    $region37: #{tpu_custom_call.1} parent=1 // pred_fallthru
      _
    // Predicated region
    $region38: #{tpu_custom_call.1} parent=1 // pred_check
      _
    $region39: #{tpu_custom_call.1} parent=1 // pred_check_branch
      %64 = sbr.rel (0) target = $region41
    $region40: #{tpu_custom_call.1} parent=1 // pred_region
      %65 = dma.done [#allocation6], 4096
    $region41: #{tpu_custom_call.1} parent=1 // pred_fallthru
      _
    %v67 = vld [vmem:[#allocation2] sm:$0xff]
    %v68 = vpack.c.bf16 %v67, %v67
    %v69 = vld [vmem:[#allocation5] sm:$0xff]
    %v70 = vld [vmem:[#allocation5 + $0x8] sm:$0xff]
    %v71 = vld [vmem:[#allocation5 + $0x10] sm:$0xff]
    %v72 = vld [vmem:[#allocation5 + $0x18] sm:$0xff]
    %v73 = vld [vmem:[%s2] sm:$0x3]
    %v75 = vlaneseq
    %v76 = vshrl.u32 %v75, 7
    %v77 = vsub.s32 0, %v76
    %v78 = vrot.slane %v73, %v77
    %v79 = vlaneseq
    %v80 = vshrl.u32 %v79, 7
    %v81 = vsub.s32 1, %v80
    %v82 = vrot.slane %v73, %v81
    %v89 = vunpack.c.l.b16 %v69
    %v90 = vunpack.c.h.b16 %v69
    %v91 = vunpack.c.l.b16 %v70
    %v92 = vunpack.c.h.b16 %v70
    %v93 = vunpack.c.l.b16 %v71
    %v94 = vunpack.c.h.b16 %v71
    %v95 = vunpack.c.l.b16 %v72
    %v96 = vunpack.c.h.b16 %v72
    %v97 = vpack.c.b16 %v91, %v89
    %v98 = vpack.c.b16 %v92, %v90
    %v99 = vpack.c.b16 %v95, %v93
    %v100 = vpack.c.b16 %v96, %v94
    %vm105 = vcmask 261120
    %v107 = vsel %vm105, %v68, 0
    %109 = vmatprep.subr.bf16.mxu0 %v98
    %110 = vmatpush1.bf16.msra.mxu0 %v97
    %111 = vmatprep.subr.bf16.mxu0 %v100
    %112 = vmatpush1.bf16.msra.mxu0 %v99
    %113 = vmatprep.subr.bf16.mxu0 0
    %114 = vmatpush1.bf16.msra.mxu0 0
    %115 = vmatprep.subr.bf16.mxu0 0
    %116 = vmatpush1.bf16.msra.mxu0 0
    %117 = vmatprep.subr.bf16.mxu0 0
    %118 = vmatpush1.bf16.msra.mxu0 0
    %119 = vmatprep.subr.bf16.mxu0 0
    %120 = vmatpush1.bf16.msra.mxu0 0
    %121 = vmatprep.subr.bf16.mxu0 0
    %122 = vmatpush1.bf16.msra.mxu0 0
    %123 = vmatprep.subr.bf16.mxu0 0
    %124 = vmatpush1.bf16.msra.mxu0 0
    %125 = vmatprep.subr.bf16.mxu0 0
    %126 = vmatpush1.bf16.msra.mxu0 0
    %127 = vmatprep.subr.bf16.mxu0 0
    %128 = vmatpush1.bf16.msra.mxu0 0
    %129 = vmatprep.subr.bf16.mxu0 0
    %130 = vmatpush1.bf16.msra.mxu0 0
    %131 = vmatprep.subr.bf16.mxu0 0
    %132 = vmatpush1.bf16.msra.mxu0 0
    %133 = vmatprep.subr.bf16.mxu0 0
    %134 = vmatpush1.bf16.msra.mxu0 0
    %135 = vmatprep.subr.bf16.mxu0 0
    %136 = vmatpush1.bf16.msra.mxu0 0
    %137 = vmatprep.subr.bf16.mxu0 0
    %138 = vmatpush1.bf16.msra.mxu0 0
    %139 = vmatprep.subr.bf16.mxu0 0
    %140 = vmatpush1.bf16.msra.mxu0 0
    %141 = vmatprep.mubr.bf16.mxu0 0
    %142 = vmatmul.mubr.bf16.gmra.mrb[0].mxu0 %v107
    %v143 = vpop.f32.mrb[0].mxu0
    %v144 = vadd.f32 %v78, %v143
    %v145 = vpop.f32.mrb[0].mxu0
    %v146 = vadd.f32 %v82, %v145
    %v147 = vpop.f32.mrb[0].mxu0
    %v148 = vpop.f32.mrb[0].mxu0
    %149 = vdwg.mxu0
    %v150 = vmul.f32 %v144, %v144
    %v151 = vmul.f32 %v146, %v146
    %v152 = vmul.f32 %v144, %v150
    %v153 = vmul.f32 %v146, %v151
    %v154 = vmul.f32 %v152, 0.044715
    %v155 = vmul.f32 %v153, 0.044715
    %v156 = vadd.f32 %v144, %v154
    %v157 = vadd.f32 %v146, %v155
    %v158 = vmul.f32 %v156, 0.7978846
    %v159 = vmul.f32 %v157, 0.7978846
    %v160 = vtanh.pop %v158
    %v161 = vtanh.pop %v159
    %v162 = vadd.f32 %v160, 1.0
    %v163 = vadd.f32 %v161, 1.0
    %v164 = vmul.f32 %v162, 0.5
    %v165 = vmul.f32 %v163, 0.5
    %v166 = vmul.f32 %v144, %v164
    %v167 = vmul.f32 %v146, %v165
    %v168 = vpack.c.bf16 %v166, %v166
    %v169 = vpack.c.bf16 %v167, %v167
    %v170 = vld [vmem:[#allocation7] sm:$0xff]
    %v171 = vld [vmem:[#allocation7 + $0x8] sm:$0xff]
    %v172 = vld [vmem:[#allocation7 + $0x10] sm:$0xff]
    %v173 = vld [vmem:[#allocation7 + $0x18] sm:$0xff]
    %v174 = vld [vmem:[#allocation7 + $0x20] sm:$0xff]
    %v175 = vld [vmem:[#allocation7 + $0x28] sm:$0xff]
    %v176 = vld [vmem:[#allocation7 + $0x30] sm:$0xff]
    %v177 = vld [vmem:[#allocation7 + $0x38] sm:$0xff]
    %v178 = vld [vmem:[#allocation7 + $0x40] sm:$0xff]
    %v179 = vld [vmem:[#allocation7 + $0x48] sm:$0xff]
    %v180 = vld [vmem:[#allocation7 + $0x50] sm:$0xff]
    %v181 = vld [vmem:[#allocation7 + $0x58] sm:$0xff]
    %v182 = vld [vmem:[#allocation7 + $0x60] sm:$0xff]
    %v183 = vld [vmem:[#allocation7 + $0x68] sm:$0xff]
    %v184 = vld [vmem:[#allocation7 + $0x70] sm:$0xff]
    %v185 = vld [vmem:[#allocation7 + $0x78] sm:$0xff]
    %v186 = vld [vmem:[#allocation7 + $0x80] sm:$0xff]
    %v187 = vld [vmem:[#allocation7 + $0x88] sm:$0xff]
    %v188 = vld [vmem:[#allocation7 + $0x90] sm:$0xff]
    %v189 = vld [vmem:[#allocation7 + $0x98] sm:$0xff]
    %v190 = vld [vmem:[#allocation7 + $0xa0] sm:$0xff]
    %v191 = vld [vmem:[#allocation7 + $0xa8] sm:$0xff]
    %v192 = vld [vmem:[#allocation7 + $0xb0] sm:$0xff]
    %v193 = vld [vmem:[#allocation7 + $0xb8] sm:$0xff]
    %v194 = vld [vmem:[#allocation7 + $0xc0] sm:$0xff]
    %v195 = vld [vmem:[#allocation7 + $0xc8] sm:$0xff]
    %v196 = vld [vmem:[#allocation7 + $0xd0] sm:$0xff]
    %v197 = vld [vmem:[#allocation7 + $0xd8] sm:$0xff]
    %v198 = vld [vmem:[#allocation7 + $0xe0] sm:$0xff]
    %v199 = vld [vmem:[#allocation7 + $0xe8] sm:$0xff]
    %v200 = vld [vmem:[#allocation7 + $0xf0] sm:$0xff]
    %v201 = vld [vmem:[#allocation7 + $0xf8] sm:$0xff]
    %v202 = vld [vmem:[%s4] sm:$0x3]
    %v204 = vlaneseq
    %v205 = vshrl.u32 %v204, 7
    %v206 = vsub.s32 0, %v205
    %v207 = vrot.slane %v202, %v206
    %v208 = vlaneseq
    %v209 = vshrl.u32 %v208, 7
    %v210 = vsub.s32 1, %v209
    %v211 = vrot.slane %v202, %v210
    %v246 = vunpack.c.l.b16 %v170
    %v247 = vunpack.c.h.b16 %v170
    %v248 = vunpack.c.l.b16 %v171
    %v249 = vunpack.c.h.b16 %v171
    %v250 = vunpack.c.l.b16 %v172
    %v251 = vunpack.c.h.b16 %v172
    %v252 = vunpack.c.l.b16 %v173
    %v253 = vunpack.c.h.b16 %v173
    %v254 = vunpack.c.l.b16 %v174
    %v255 = vunpack.c.h.b16 %v174
    %v256 = vunpack.c.l.b16 %v175
    %v257 = vunpack.c.h.b16 %v175
    %v258 = vunpack.c.l.b16 %v176
    %v259 = vunpack.c.h.b16 %v176
    %v260 = vunpack.c.l.b16 %v177
    %v261 = vunpack.c.h.b16 %v177
    %v262 = vunpack.c.l.b16 %v178
    %v263 = vunpack.c.h.b16 %v178
    %v264 = vunpack.c.l.b16 %v179
    %v265 = vunpack.c.h.b16 %v179
    %v266 = vunpack.c.l.b16 %v180
    %v267 = vunpack.c.h.b16 %v180
    %v268 = vunpack.c.l.b16 %v181
    %v269 = vunpack.c.h.b16 %v181
    %v270 = vunpack.c.l.b16 %v182
    %v271 = vunpack.c.h.b16 %v182
    %v272 = vunpack.c.l.b16 %v183
    %v273 = vunpack.c.h.b16 %v183
    %v274 = vunpack.c.l.b16 %v184
    %v275 = vunpack.c.h.b16 %v184
    %v276 = vunpack.c.l.b16 %v185
    %v277 = vunpack.c.h.b16 %v185
    %v278 = vunpack.c.l.b16 %v186
    %v279 = vunpack.c.h.b16 %v186
    %v280 = vunpack.c.l.b16 %v187
    %v281 = vunpack.c.h.b16 %v187
    %v282 = vunpack.c.l.b16 %v188
    %v283 = vunpack.c.h.b16 %v188
    %v284 = vunpack.c.l.b16 %v189
    %v285 = vunpack.c.h.b16 %v189
    %v286 = vunpack.c.l.b16 %v190
    %v287 = vunpack.c.h.b16 %v190
    %v288 = vunpack.c.l.b16 %v191
    %v289 = vunpack.c.h.b16 %v191
    %v290 = vunpack.c.l.b16 %v192
    %v291 = vunpack.c.h.b16 %v192
    %v292 = vunpack.c.l.b16 %v193
    %v293 = vunpack.c.h.b16 %v193
    %v294 = vunpack.c.l.b16 %v194
    %v295 = vunpack.c.h.b16 %v194
    %v296 = vunpack.c.l.b16 %v195
    %v297 = vunpack.c.h.b16 %v195
    %v298 = vunpack.c.l.b16 %v196
    %v299 = vunpack.c.h.b16 %v196
    %v300 = vunpack.c.l.b16 %v197
    %v301 = vunpack.c.h.b16 %v197
    %v302 = vunpack.c.l.b16 %v198
    %v303 = vunpack.c.h.b16 %v198
    %v304 = vunpack.c.l.b16 %v199
    %v305 = vunpack.c.h.b16 %v199
    %v306 = vunpack.c.l.b16 %v200
    %v307 = vunpack.c.h.b16 %v200
    %v308 = vunpack.c.l.b16 %v201
    %v309 = vunpack.c.h.b16 %v201
    %v310 = vpack.c.b16 %v248, %v246
    %v311 = vpack.c.b16 %v249, %v247
    %v312 = vpack.c.b16 %v252, %v250
    %v313 = vpack.c.b16 %v253, %v251
    %v314 = vpack.c.b16 %v256, %v254
    %v315 = vpack.c.b16 %v257, %v255
    %v316 = vpack.c.b16 %v260, %v258
    %v317 = vpack.c.b16 %v261, %v259
    %v318 = vpack.c.b16 %v264, %v262
    %v319 = vpack.c.b16 %v265, %v263
    %v320 = vpack.c.b16 %v268, %v266
    %v321 = vpack.c.b16 %v269, %v267
    %v322 = vpack.c.b16 %v272, %v270
    %v323 = vpack.c.b16 %v273, %v271
    %v324 = vpack.c.b16 %v276, %v274
    %v325 = vpack.c.b16 %v277, %v275
    %v326 = vpack.c.b16 %v280, %v278
    %v327 = vpack.c.b16 %v281, %v279
    %v328 = vpack.c.b16 %v284, %v282
    %v329 = vpack.c.b16 %v285, %v283
    %v330 = vpack.c.b16 %v288, %v286
    %v331 = vpack.c.b16 %v289, %v287
    %v332 = vpack.c.b16 %v292, %v290
    %v333 = vpack.c.b16 %v293, %v291
    %v334 = vpack.c.b16 %v296, %v294
    %v335 = vpack.c.b16 %v297, %v295
    %v336 = vpack.c.b16 %v300, %v298
    %v337 = vpack.c.b16 %v301, %v299
    %v338 = vpack.c.b16 %v304, %v302
    %v339 = vpack.c.b16 %v305, %v303
    %v340 = vpack.c.b16 %v308, %v306
    %v341 = vpack.c.b16 %v309, %v307
    %374 = vmatprep.subr.bf16.mxu0 %v311
    %375 = vmatpush1.bf16.msra.mxu0 %v310
    %376 = vmatprep.subr.bf16.mxu0 %v313
    %377 = vmatpush1.bf16.msra.mxu0 %v312
    %378 = vmatprep.subr.bf16.mxu0 %v315
    %379 = vmatpush1.bf16.msra.mxu0 %v314
    %380 = vmatprep.subr.bf16.mxu0 %v317
    %381 = vmatpush1.bf16.msra.mxu0 %v316
    %382 = vmatprep.subr.bf16.mxu0 %v319
    %383 = vmatpush1.bf16.msra.mxu0 %v318
    %384 = vmatprep.subr.bf16.mxu0 %v321
    %385 = vmatpush1.bf16.msra.mxu0 %v320
    %386 = vmatprep.subr.bf16.mxu0 %v323
    %387 = vmatpush1.bf16.msra.mxu0 %v322
    %388 = vmatprep.subr.bf16.mxu0 %v325
    %389 = vmatpush1.bf16.msra.mxu0 %v324
    %390 = vmatprep.subr.bf16.mxu0 %v327
    %391 = vmatpush1.bf16.msra.mxu0 %v326
    %392 = vmatprep.subr.bf16.mxu0 %v329
    %393 = vmatpush1.bf16.msra.mxu0 %v328
    %394 = vmatprep.subr.bf16.mxu0 %v331
    %395 = vmatpush1.bf16.msra.mxu0 %v330
    %396 = vmatprep.subr.bf16.mxu0 %v333
    %397 = vmatpush1.bf16.msra.mxu0 %v332
    %398 = vmatprep.subr.bf16.mxu0 %v335
    %399 = vmatpush1.bf16.msra.mxu0 %v334
    %400 = vmatprep.subr.bf16.mxu0 %v337
    %401 = vmatpush1.bf16.msra.mxu0 %v336
    %402 = vmatprep.subr.bf16.mxu0 %v339
    %403 = vmatpush1.bf16.msra.mxu0 %v338
    %404 = vmatprep.subr.bf16.mxu0 %v341
    %405 = vmatpush1.bf16.msra.mxu0 %v340
    %406 = vmatprep.mubr.bf16.mxu0 %v169
    %407 = vmatmul.mubr.bf16.gmra.mrb[0].mxu0 %v168
    %v408 = vpop.f32.mrb[0].mxu0
    %v409 = vadd.f32 %v207, %v408
    %v410 = vpop.f32.mrb[0].mxu0
    %v411 = vadd.f32 %v211, %v410
    %v412 = vpop.f32.mrb[0].mxu0
    %v413 = vpop.f32.mrb[0].mxu0
    %414 = vdwg.mxu0
    %v415 = vadd.f32 %v144, %v409
    %v416 = vadd.f32 %v146, %v411
    %v417 = vadd.f32 %v415, %v416
    %418 = vadd.xlane.f32.xlu0 %v417
    %v419 = vpop.xlane.xlu0 %418
    %v420 = vmul.f32 %v415, %v415
    %v421 = vmul.f32 %v416, %v416
    %v422 = vadd.f32 %v420, %v421
    %423 = vadd.xlane.f32.xlu0 %v422
    %v424 = vpop.xlane.xlu0 %423
    %v425 = vmul.f32 %v419, 0.00390625
    %v426 = vmul.f32 %v424, 0.00390625
    %v427 = vmul.f32 %v425, %v425
    %v428 = vsub.f32 %v426, %v427
    %v429 = vmax.f32 %v428, 0.0
    %v430 = vsub.f32 %v415, %v425
    %v431 = vsub.f32 %v416, %v425
    %v432 = vadd.f32 %v429, 1e-05
    %v433 = vrsqrt.pop %v432
    %v434 = vmul.f32 %v430, %v433
    %v435 = vmul.f32 %v431, %v433
    %v436 = vld [vmem:[%s5] sm:$0x3]
    %v438 = vlaneseq
    %v439 = vshrl.u32 %v438, 7
    %v440 = vsub.s32 0, %v439
    %v441 = vrot.slane %v436, %v440
    %v442 = vlaneseq
    %v443 = vshrl.u32 %v442, 7
    %v444 = vsub.s32 1, %v443
    %v445 = vrot.slane %v436, %v444
    %v448 = vmul.f32 %v434, %v441
    %v449 = vmul.f32 %v435, %v445
    %v450 = vld [vmem:[%s6] sm:$0x3]
    %v452 = vlaneseq
    %v453 = vshrl.u32 %v452, 7
    %v454 = vsub.s32 0, %v453
    %v455 = vrot.slane %v450, %v454
    %v456 = vlaneseq
    %v457 = vshrl.u32 %v456, 7
    %v458 = vsub.s32 1, %v457
    %v459 = vrot.slane %v450, %v458
    %v462 = vadd.f32 %v448, %v455
    %v463 = vadd.f32 %v449, %v459
    %464 = vst [vmem:[#allocation8] sm:$0xff] %v462
    %465 = vst [vmem:[#allocation8 + $0x8] sm:$0xff] %v463
    // Predicated region
    $region42: #{tpu_custom_call.1} parent=1 // pred_check
      _
    $region43: #{tpu_custom_call.1} parent=1 // pred_check_branch
      %467 = sbr.rel (0) target = $region45
    $region44: #{tpu_custom_call.1} parent=1 // pred_region
      %s469 = ssub.s32 256, 256
      %470 = vsyncadd [#allocation4], %s469
      %s472 = sshll.u32 [#allocation8], 4
      %s473 = int_to_ptr.vmem [resolvable:$true] %s472
      %475 = dma.vmem_to_hbm [thread:$0]  %s473, 256, %s7, [#allocation4]
    $region45: #{tpu_custom_call.1} parent=1 // pred_fallthru
      _
    // Predicated region
    $region46: #{tpu_custom_call.1} parent=1 // pred_check
      _
    $region47: #{tpu_custom_call.1} parent=1 // pred_check_branch
      %477 = sbr.rel (0) target = $region49
    $region48: #{tpu_custom_call.1} parent=1 // pred_region
      %478 = dma.done [#allocation4], 256
    $region49: #{tpu_custom_call.1} parent=1 // pred_fallthru
      _
    %479 = vsyncpa [#allocation3], 1
    %480 = vsyncpa [#allocation6], 1
    %481 = vsyncpa [#allocation4], 1

// kernel: tpu_custom_call.1
$region0: #{tpu_custom_call.1}
  #allocation0 [shape = 'u32[]', space=smem, size = 0x4, offset = 0x4, fixed_abs, tag = 'smem constant byte address 0x4 - core index']
  #allocation1 [shape = 'u32[144,128]{1,0:T(1,128)}', space=vmem, size = 0x12000, scoped, tag = 'internal scratch']
  %s0 = inlined_call_operand.hbm [shape: f32[8,32], index: 0, kind: input, shape index: {}]
  %s1 = inlined_call_operand.hbm [shape: bf16[32,256], index: 1, kind: input, shape index: {}]
  %s2 = inlined_call_operand.vmem [shape: f32[1,256], index: 2, kind: input, shape index: {}]
  %s3 = inlined_call_operand.hbm [shape: bf16[256,256], index: 3, kind: input, shape index: {}]
  %s4 = inlined_call_operand.vmem [shape: f32[1,256], index: 4, kind: input, shape index: {}]
  %s5 = inlined_call_operand.vmem [shape: f32[1,256], index: 5, kind: input, shape index: {}]
  %s6 = inlined_call_operand.vmem [shape: f32[1,256], index: 6, kind: input, shape index: {}]
  %s7 = inlined_call_operand.hbm [shape: f32[8,256], index: 7, kind: output, shape index: {}]
  %s8 = sld [smem:[#allocation0]]
  $region50: #{tpu_custom_call.1} parent=0
    _
  %s10 = ssub.s32 1, %s8
  %s11 = scalar_select 0, %s10, %s8
  $region1: #{tpu_custom_call.1} parent=0
    #allocation2 [shape = 'u8[4096]{0}', space=vmem, size = 0x1000, scoped, tag = 'input window, operand 0, single buffered']
    #allocation3 [shape = 's32[1]{0}', space=sflag, size = 0x4, scoped, tag = 'scoped memory for tpu_custom_call.1']
    #allocation4 [shape = 's32[1]{0}', space=sflag, size = 0x4, scoped, tag = 'scoped memory for tpu_custom_call.1']
    #allocation5 [shape = 'u8[16384]{0}', space=vmem, size = 0x4000, scoped, tag = 'input window, operand 1, single buffered']
    #allocation6 [shape = 's32[1]{0}', space=sflag, size = 0x4, scoped, tag = 'scoped memory for tpu_custom_call.1']
    #allocation7 [shape = 'u8[131072]{0}', space=vmem, size = 0x20000, scoped, tag = 'input window, operand 3, single buffered']
    #allocation8 [shape = 'u8[8192]{0}', space=vmem, size = 0x2000, scoped, tag = 'output window, operand 0, single buffered']
    %12 = vsyncpa [#allocation3], 0
    %13 = vsyncpa [#allocation6], 0
    %14 = vsyncpa [#allocation4], 0
    // Predicated region
    $region2: #{tpu_custom_call.1} parent=1 // pred_check
      _
    $region3: #{tpu_custom_call.1} parent=1 // pred_check_branch
      %16 = sbr.rel (0) target = $region5
    $region4: #{tpu_custom_call.1} parent=1 // pred_region
      %s18 = ssub.s32 128, 128
      %19 = vsyncadd [#allocation3], %s18
      %s21 = sshll.u32 [#allocation2], 4
      %s22 = int_to_ptr.vmem [resolvable:$true] %s21
      %24 = dma.hbm_to_vmem [thread:$0]  %s0, 128, %s22, [#allocation3]
    $region5: #{tpu_custom_call.1} parent=1 // pred_fallthru
      _
    // Predicated region
    $region6: #{tpu_custom_call.1} parent=1 // pred_check
      _
    $region7: #{tpu_custom_call.1} parent=1 // pred_check_branch
      %26 = sbr.rel (0) target = $region9
    $region8: #{tpu_custom_call.1} parent=1 // pred_region
      %s28 = ssub.s32 512, 512
      %29 = vsyncadd [#allocation6], %s28
      %s30 = sshll.u32 [#allocation5], 4
      %s31 = int_to_ptr.vmem [resolvable:$true] %s30
      %36 = dma.hbm_to_vmem [thread:$0]  %s1, 512, %s31, [#allocation6], 128, 128, 8
    $region9: #{tpu_custom_call.1} parent=1 // pred_fallthru
      _
    // Predicated region
    $region10: #{tpu_custom_call.1} parent=1 // pred_check
      _
    $region11: #{tpu_custom_call.1} parent=1 // pred_check_branch
      %38 = sbr.rel (0) target = $region13
    $region12: #{tpu_custom_call.1} parent=1 // pred_region
      _
    $region13: #{tpu_custom_call.1} parent=1 // pred_fallthru
      _
    // Predicated region
    $region14: #{tpu_custom_call.1} parent=1 // pred_check
      _
    $region15: #{tpu_custom_call.1} parent=1 // pred_check_branch
      %40 = sbr.rel (0) target = $region17
    $region16: #{tpu_custom_call.1} parent=1 // pred_region
      %s42 = ssub.s32 4096, 4096
      %43 = vsyncadd [#allocation6], %s42
      %s44 = sshll.u32 [#allocation7], 4
      %s45 = int_to_ptr.vmem [resolvable:$true] %s44
      %50 = dma.hbm_to_vmem [thread:$0]  %s3, 4096, %s45, [#allocation6], 128, 128, 8
    $region17: #{tpu_custom_call.1} parent=1 // pred_fallthru
      _
    // Predicated region
    $region18: #{tpu_custom_call.1} parent=1 // pred_check
      _
    $region19: #{tpu_custom_call.1} parent=1 // pred_check_branch
      %52 = sbr.rel (0) target = $region21
    $region20: #{tpu_custom_call.1} parent=1 // pred_region
      _
    $region21: #{tpu_custom_call.1} parent=1 // pred_fallthru
      _
    // Predicated region
    $region22: #{tpu_custom_call.1} parent=1 // pred_check
      _
    $region23: #{tpu_custom_call.1} parent=1 // pred_check_branch
      %54 = sbr.rel (0) target = $region25
    $region24: #{tpu_custom_call.1} parent=1 // pred_region
      _
    $region25: #{tpu_custom_call.1} parent=1 // pred_fallthru
      _
    // Predicated region
    $region26: #{tpu_custom_call.1} parent=1 // pred_check
      _
    $region27: #{tpu_custom_call.1} parent=1 // pred_check_branch
      %56 = sbr.rel (0) target = $region29
    $region28: #{tpu_custom_call.1} parent=1 // pred_region
      _
    $region29: #{tpu_custom_call.1} parent=1 // pred_fallthru
      _
    // Predicated region
    $region30: #{tpu_custom_call.1} parent=1 // pred_check
      _
    $region31: #{tpu_custom_call.1} parent=1 // pred_check_branch
      %58 = sbr.rel (0) target = $region33
    $region32: #{tpu_custom_call.1} parent=1 // pred_region
      %59 = dma.done [#allocation3], 128
    $region33: #{tpu_custom_call.1} parent=1 // pred_fallthru
      _
    // Predicated region
    $region34: #{tpu_custom_call.1} parent=1 // pred_check
      _
    $region35: #{tpu_custom_call.1} parent=1 // pred_check_branch
      %61 = sbr.rel (0) target = $region37
    $region36: #{tpu_custom_call.1} parent=1 // pred_region
      %62 = dma.done [#allocation6], 512
    $region37: #{tpu_custom_call.1} parent=1 // pred_fallthru
      _
    // Predicated region
    $region38: #{tpu_custom_call.1} parent=1 // pred_check
      _
    $region39: #{tpu_custom_call.1} parent=1 // pred_check_branch
      %64 = sbr.rel (0) target = $region41
    $region40: #{tpu_custom_call.1} parent=1 // pred_region
      %65 = dma.done [#allocation6], 4096
    $region41: #{tpu_custom_call.1} parent=1 // pred_fallthru
      _
    %v67 = vld [vmem:[#allocation2] sm:$0xff]
    %v68 = vpack.c.bf16 %v67, %v67
    %v69 = vld [vmem:[#allocation5] sm:$0xff]
    %v70 = vld [vmem:[#allocation5 + $0x8] sm:$0xff]
    %v71 = vld [vmem:[#allocation5 + $0x10] sm:$0xff]
    %v72 = vld [vmem:[#allocation5 + $0x18] sm:$0xff]
    %v73 = vld [vmem:[%s2] sm:$0x3]
    %v75 = vlaneseq
    %v76 = vshrl.u32 %v75, 7
    %v77 = vsub.s32 0, %v76
    %v78 = vrot.slane %v73, %v77
    %v79 = vlaneseq
    %v80 = vshrl.u32 %v79, 7
    %v81 = vsub.s32 1, %v80
    %v82 = vrot.slane %v73, %v81
    %v89 = vunpack.c.l.b16 %v69
    %v90 = vunpack.c.h.b16 %v69
    %v91 = vunpack.c.l.b16 %v70
    %v92 = vunpack.c.h.b16 %v70
    %v93 = vunpack.c.l.b16 %v71
    %v94 = vunpack.c.h.b16 %v71
    %v95 = vunpack.c.l.b16 %v72
    %v96 = vunpack.c.h.b16 %v72
    %v97 = vpack.c.b16 %v91, %v89
    %v98 = vpack.c.b16 %v92, %v90
    %v99 = vpack.c.b16 %v95, %v93
    %v100 = vpack.c.b16 %v96, %v94
    %vm105 = vcmask 261120
    %v107 = vsel %vm105, %v68, 0
    %109 = vmatprep.subr.bf16.mxu0 %v98
    %110 = vmatpush1.bf16.msra.mxu0 %v97
    %111 = vmatprep.subr.bf16.mxu0 %v100
    %112 = vmatpush1.bf16.msra.mxu0 %v99
    %113 = vmatprep.subr.bf16.mxu0 0
    %114 = vmatpush1.bf16.msra.mxu0 0
    %115 = vmatprep.subr.bf16.mxu0 0
    %116 = vmatpush1.bf16.msra.mxu0 0
    %117 = vmatprep.subr.bf16.mxu0 0
    %118 = vmatpush1.bf16.msra.mxu0 0
    %119 = vmatprep.subr.bf16.mxu0 0
    %120 = vmatpush1.bf16.msra.mxu0 0
    %121 = vmatprep.subr.bf16.mxu0 0
    %122 = vmatpush1.bf16.msra.mxu0 0
    %123 = vmatprep.subr.bf16.mxu0 0
    %124 = vmatpush1.bf16.msra.mxu0 0
    %125 = vmatprep.subr.bf16.mxu0 0
    %126 = vmatpush1.bf16.msra.mxu0 0
    %127 = vmatprep.subr.bf16.mxu0 0
    %128 = vmatpush1.bf16.msra.mxu0 0
    %129 = vmatprep.subr.bf16.mxu0 0
    %130 = vmatpush1.bf16.msra.mxu0 0
    %131 = vmatprep.subr.bf16.mxu0 0
    %132 = vmatpush1.bf16.msra.mxu0 0
    %133 = vmatprep.subr.bf16.mxu0 0
    %134 = vmatpush1.bf16.msra.mxu0 0
    %135 = vmatprep.subr.bf16.mxu0 0
    %136 = vmatpush1.bf16.msra.mxu0 0
    %137 = vmatprep.subr.bf16.mxu0 0
    %138 = vmatpush1.bf16.msra.mxu0 0
    %139 = vmatprep.subr.bf16.mxu0 0
    %140 = vmatpush1.bf16.msra.mxu0 0
    %141 = vmatprep.mubr.bf16.mxu0 0
    %142 = vmatmul.mubr.bf16.gmra.mrb[0].mxu0 %v107
    %v143 = vpop.f32.mrb[0].mxu0
    %v144 = vadd.f32 %v78, %v143
    %v145 = vpop.f32.mrb[0].mxu0
    %v146 = vadd.f32 %v82, %v145
    %v147 = vpop.f32.mrb[0].mxu0
    %v148 = vpop.f32.mrb[0].mxu0
    %149 = vdwg.mxu0
    %v150 = vmul.f32 %v144, %v144
    %v151 = vmul.f32 %v146, %v146
    %v152 = vmul.f32 %v144, %v150
    %v153 = vmul.f32 %v146, %v151
    %v154 = vmul.f32 %v152, 0.044715
    %v155 = vmul.f32 %v153, 0.044715
    %v156 = vadd.f32 %v144, %v154
    %v157 = vadd.f32 %v146, %v155
    %v158 = vmul.f32 %v156, 0.7978846
    %v159 = vmul.f32 %v157, 0.7978846
    %v160 = vtanh.pop %v158
    %v161 = vtanh.pop %v159
    %v162 = vadd.f32 %v160, 1.0
    %v163 = vadd.f32 %v161, 1.0
    %v164 = vmul.f32 %v162, 0.5
    %v165 = vmul.f32 %v163, 0.5
    %v166 = vmul.f32 %v144, %v164
    %v167 = vmul.f32 %v146, %v165
    %v168 = vpack.c.bf16 %v166, %v166
    %v169 = vpack.c.bf16 %v167, %v167
    %v170 = vld [vmem:[#allocation7] sm:$0xff]
    %v171 = vld [vmem:[#allocation7 + $0x8] sm:$0xff]
    %v172 = vld [vmem:[#allocation7 + $0x10] sm:$0xff]
    %v173 = vld [vmem:[#allocation7 + $0x18] sm:$0xff]
    %v174 = vld [vmem:[#allocation7 + $0x20] sm:$0xff]
    %v175 = vld [vmem:[#allocation7 + $0x28] sm:$0xff]
    %v176 = vld [vmem:[#allocation7 + $0x30] sm:$0xff]
    %v177 = vld [vmem:[#allocation7 + $0x38] sm:$0xff]
    %v178 = vld [vmem:[#allocation7 + $0x40] sm:$0xff]
    %v179 = vld [vmem:[#allocation7 + $0x48] sm:$0xff]
    %v180 = vld [vmem:[#allocation7 + $0x50] sm:$0xff]
    %v181 = vld [vmem:[#allocation7 + $0x58] sm:$0xff]
    %v182 = vld [vmem:[#allocation7 + $0x60] sm:$0xff]
    %v183 = vld [vmem:[#allocation7 + $0x68] sm:$0xff]
    %v184 = vld [vmem:[#allocation7 + $0x70] sm:$0xff]
    %v185 = vld [vmem:[#allocation7 + $0x78] sm:$0xff]
    %v186 = vld [vmem:[#allocation7 + $0x80] sm:$0xff]
    %v187 = vld [vmem:[#allocation7 + $0x88] sm:$0xff]
    %v188 = vld [vmem:[#allocation7 + $0x90] sm:$0xff]
    %v189 = vld [vmem:[#allocation7 + $0x98] sm:$0xff]
    %v190 = vld [vmem:[#allocation7 + $0xa0] sm:$0xff]
    %v191 = vld [vmem:[#allocation7 + $0xa8] sm:$0xff]
    %v192 = vld [vmem:[#allocation7 + $0xb0] sm:$0xff]
    %v193 = vld [vmem:[#allocation7 + $0xb8] sm:$0xff]
    %v194 = vld [vmem:[#allocation7 + $0xc0] sm:$0xff]
    %v195 = vld [vmem:[#allocation7 + $0xc8] sm:$0xff]
    %v196 = vld [vmem:[#allocation7 + $0xd0] sm:$0xff]
    %v197 = vld [vmem:[#allocation7 + $0xd8] sm:$0xff]
    %v198 = vld [vmem:[#allocation7 + $0xe0] sm:$0xff]
    %v199 = vld [vmem:[#allocation7 + $0xe8] sm:$0xff]
    %v200 = vld [vmem:[#allocation7 + $0xf0] sm:$0xff]
    %v201 = vld [vmem:[#allocation7 + $0xf8] sm:$0xff]
    %v202 = vld [vmem:[%s4] sm:$0x3]
    %v204 = vlaneseq
    %v205 = vshrl.u32 %v204, 7
    %v206 = vsub.s32 0, %v205
    %v207 = vrot.slane %v202, %v206
    %v208 = vlaneseq
    %v209 = vshrl.u32 %v208, 7
    %v210 = vsub.s32 1, %v209
    %v211 = vrot.slane %v202, %v210
    %v246 = vunpack.c.l.b16 %v170
    %v247 = vunpack.c.h.b16 %v170
    %v248 = vunpack.c.l.b16 %v171
    %v249 = vunpack.c.h.b16 %v171
    %v250 = vunpack.c.l.b16 %v172
    %v251 = vunpack.c.h.b16 %v172
    %v252 = vunpack.c.l.b16 %v173
    %v253 = vunpack.c.h.b16 %v173
    %v254 = vunpack.c.l.b16 %v174
    %v255 = vunpack.c.h.b16 %v174
    %v256 = vunpack.c.l.b16 %v175
    %v257 = vunpack.c.h.b16 %v175
    %v258 = vunpack.c.l.b16 %v176
    %v259 = vunpack.c.h.b16 %v176
    %v260 = vunpack.c.l.b16 %v177
    %v261 = vunpack.c.h.b16 %v177
    %v262 = vunpack.c.l.b16 %v178
    %v263 = vunpack.c.h.b16 %v178
    %v264 = vunpack.c.l.b16 %v179
    %v265 = vunpack.c.h.b16 %v179
    %v266 = vunpack.c.l.b16 %v180
    %v267 = vunpack.c.h.b16 %v180
    %v268 = vunpack.c.l.b16 %v181
    %v269 = vunpack.c.h.b16 %v181
    %v270 = vunpack.c.l.b16 %v182
    %v271 = vunpack.c.h.b16 %v182
    %v272 = vunpack.c.l.b16 %v183
    %v273 = vunpack.c.h.b16 %v183
    %v274 = vunpack.c.l.b16 %v184
    %v275 = vunpack.c.h.b16 %v184
    %v276 = vunpack.c.l.b16 %v185
    %v277 = vunpack.c.h.b16 %v185
    %v278 = vunpack.c.l.b16 %v186
    %v279 = vunpack.c.h.b16 %v186
    %v280 = vunpack.c.l.b16 %v187
    %v281 = vunpack.c.h.b16 %v187
    %v282 = vunpack.c.l.b16 %v188
    %v283 = vunpack.c.h.b16 %v188
    %v284 = vunpack.c.l.b16 %v189
    %v285 = vunpack.c.h.b16 %v189
    %v286 = vunpack.c.l.b16 %v190
    %v287 = vunpack.c.h.b16 %v190
    %v288 = vunpack.c.l.b16 %v191
    %v289 = vunpack.c.h.b16 %v191
    %v290 = vunpack.c.l.b16 %v192
    %v291 = vunpack.c.h.b16 %v192
    %v292 = vunpack.c.l.b16 %v193
    %v293 = vunpack.c.h.b16 %v193
    %v294 = vunpack.c.l.b16 %v194
    %v295 = vunpack.c.h.b16 %v194
    %v296 = vunpack.c.l.b16 %v195
    %v297 = vunpack.c.h.b16 %v195
    %v298 = vunpack.c.l.b16 %v196
    %v299 = vunpack.c.h.b16 %v196
    %v300 = vunpack.c.l.b16 %v197
    %v301 = vunpack.c.h.b16 %v197
    %v302 = vunpack.c.l.b16 %v198
    %v303 = vunpack.c.h.b16 %v198
    %v304 = vunpack.c.l.b16 %v199
    %v305 = vunpack.c.h.b16 %v199
    %v306 = vunpack.c.l.b16 %v200
    %v307 = vunpack.c.h.b16 %v200
    %v308 = vunpack.c.l.b16 %v201
    %v309 = vunpack.c.h.b16 %v201
    %v310 = vpack.c.b16 %v248, %v246
    %v311 = vpack.c.b16 %v249, %v247
    %v312 = vpack.c.b16 %v252, %v250
    %v313 = vpack.c.b16 %v253, %v251
    %v314 = vpack.c.b16 %v256, %v254
    %v315 = vpack.c.b16 %v257, %v255
    %v316 = vpack.c.b16 %v260, %v258
    %v317 = vpack.c.b16 %v261, %v259
    %v318 = vpack.c.b16 %v264, %v262
    %v319 = vpack.c.b16 %v265, %v263
    %v320 = vpack.c.b16 %v268, %v266
    %v321 = vpack.c.b16 %v269, %v267
    %v322 = vpack.c.b16 %v272, %v270
    %v323 = vpack.c.b16 %v273, %v271
    %v324 = vpack.c.b16 %v276, %v274
    %v325 = vpack.c.b16 %v277, %v275
    %v326 = vpack.c.b16 %v280, %v278
    %v327 = vpack.c.b16 %v281, %v279
    %v328 = vpack.c.b16 %v284, %v282
    %v329 = vpack.c.b16 %v285, %v283
    %v330 = vpack.c.b16 %v288, %v286
    %v331 = vpack.c.b16 %v289, %v287
    %v332 = vpack.c.b16 %v292, %v290
    %v333 = vpack.c.b16 %v293, %v291
    %v334 = vpack.c.b16 %v296, %v294
    %v335 = vpack.c.b16 %v297, %v295
    %v336 = vpack.c.b16 %v300, %v298
    %v337 = vpack.c.b16 %v301, %v299
    %v338 = vpack.c.b16 %v304, %v302
    %v339 = vpack.c.b16 %v305, %v303
    %v340 = vpack.c.b16 %v308, %v306
    %v341 = vpack.c.b16 %v309, %v307
    %374 = vmatprep.subr.bf16.mxu0 %v311
    %375 = vmatpush1.bf16.msra.mxu0 %v310
    %376 = vmatprep.subr.bf16.mxu0 %v313
    %377 = vmatpush1.bf16.msra.mxu0 %v312
    %378 = vmatprep.subr.bf16.mxu0 %v315
    %379 = vmatpush1.bf16.msra.mxu0 %v314
    %380 = vmatprep.subr.bf16.mxu0 %v317
    %381 = vmatpush1.bf16.msra.mxu0 %v316
    %382 = vmatprep.subr.bf16.mxu0 %v319
    %383 = vmatpush1.bf16.msra.mxu0 %v318
    %384 = vmatprep.subr.bf16.mxu0 %v321
    %385 = vmatpush1.bf16.msra.mxu0 %v320
    %386 = vmatprep.subr.bf16.mxu0 %v323
    %387 = vmatpush1.bf16.msra.mxu0 %v322
    %388 = vmatprep.subr.bf16.mxu0 %v325
    %389 = vmatpush1.bf16.msra.mxu0 %v324
    %390 = vmatprep.subr.bf16.mxu0 %v327
    %391 = vmatpush1.bf16.msra.mxu0 %v326
    %392 = vmatprep.subr.bf16.mxu0 %v329
    %393 = vmatpush1.bf16.msra.mxu0 %v328
    %394 = vmatprep.subr.bf16.mxu0 %v331
    %395 = vmatpush1.bf16.msra.mxu0 %v330
    %396 = vmatprep.subr.bf16.mxu0 %v333
    %397 = vmatpush1.bf16.msra.mxu0 %v332
    %398 = vmatprep.subr.bf16.mxu0 %v335
    %399 = vmatpush1.bf16.msra.mxu0 %v334
    %400 = vmatprep.subr.bf16.mxu0 %v337
    %401 = vmatpush1.bf16.msra.mxu0 %v336
    %402 = vmatprep.subr.bf16.mxu0 %v339
    %403 = vmatpush1.bf16.msra.mxu0 %v338
    %404 = vmatprep.subr.bf16.mxu0 %v341
    %405 = vmatpush1.bf16.msra.mxu0 %v340
    %406 = vmatprep.mubr.bf16.mxu0 %v169
    %407 = vmatmul.mubr.bf16.gmra.mrb[0].mxu0 %v168
    %v408 = vpop.f32.mrb[0].mxu0
    %v409 = vadd.f32 %v207, %v408
    %v410 = vpop.f32.mrb[0].mxu0
    %v411 = vadd.f32 %v211, %v410
    %v412 = vpop.f32.mrb[0].mxu0
    %v413 = vpop.f32.mrb[0].mxu0
    %414 = vdwg.mxu0
    %v415 = vadd.f32 %v144, %v409
    %v416 = vadd.f32 %v146, %v411
    %v417 = vadd.f32 %v415, %v416
    %418 = vadd.xlane.f32.xlu0 %v417
    %v419 = vpop.xlane.xlu0 %418
    %v420 = vmul.f32 %v415, %v415
    %v421 = vmul.f32 %v416, %v416
    %v422 = vadd.f32 %v420, %v421
    %423 = vadd.xlane.f32.xlu0 %v422
    %v424 = vpop.xlane.xlu0 %423
    %v425 = vmul.f32 %v419, 0.00390625
    %v426 = vmul.f32 %v424, 0.00390625
    %v427 = vmul.f32 %v425, %v425
    %v428 = vsub.f32 %v426, %v427
    %v429 = vmax.f32 %v428, 0.0
    %v430 = vsub.f32 %v415, %v425
    %v431 = vsub.f32 %v416, %v425
    %v432 = vadd.f32 %v429, 1e-05
    %v433 = vrsqrt.pop %v432
    %v434 = vmul.f32 %v430, %v433
    %v435 = vmul.f32 %v431, %v433
    %v436 = vld [vmem:[%s5] sm:$0x3]
    %v438 = vlaneseq
    %v439 = vshrl.u32 %v438, 7
    %v440 = vsub.s32 0, %v439
    %v441 = vrot.slane %v436, %v440
    %v442 = vlaneseq
    %v443 = vshrl.u32 %v442, 7
    %v444 = vsub.s32 1, %v443
    %v445 = vrot.slane %v436, %v444
    %v448 = vmul.f32 %v434, %v441
    %v449 = vmul.f32 %v435, %v445
    %v450 = vld [vmem:[%s6] sm:$0x3]
    %v452 = vlaneseq
    %v453 = vshrl.u32 %v452, 7
    %v454 = vsub.s32 0, %v453
    %v455 = vrot.slane %v450, %v454
    %v456 = vlaneseq
    %v457 = vshrl.u32 %v456, 7
    %v458 = vsub.s32 1, %v457
    %v459 = vrot.slane %v450, %v458
    %v462 = vadd.f32 %v448, %v455
    %v463 = vadd.f32 %v449, %v459
    %464 = vst [vmem:[#allocation8] sm:$0xff] %v462
    %465 = vst [vmem:[#allocation8 + $0x8] sm:$0xff] %v463
    // Predicated region
    $region42: #{tpu_custom_call.1} parent=1 // pred_check
      _
    $region43: #{tpu_custom_call.1} parent=1 // pred_check_branch
      %467 = sbr.rel (0) target = $region45
    $region44: #{tpu_custom_call.1} parent=1 // pred_region
      %s469 = ssub.s32 256, 256
      %470 = vsyncadd [#allocation4], %s469
      %s472 = sshll.u32 [#allocation8], 4
      %s473 = int_to_ptr.vmem [resolvable:$true] %s472
      %475 = dma.vmem_to_hbm [thread:$0]  %s473, 256, %s7, [#allocation4]
    $region45: #{tpu_custom_call.1} parent=1 // pred_fallthru
      _
    // Predicated region
    $region46: #{tpu_custom_call.1} parent=1 // pred_check
      _
    $region47: #{tpu_custom_call.1} parent=1 // pred_check_branch
      %477 = sbr.rel (0) target = $region49
    $region48: #{tpu_custom_call.1} parent=1 // pred_region
      %478 = dma.done [#allocation4], 256
    $region49: #{tpu_custom_call.1} parent=1 // pred_fallthru
      _
    %479 = vsyncpa [#allocation3], 1
    %480 = vsyncpa [#allocation6], 1
    %481 = vsyncpa [#allocation4], 1

</llo_original>
